<compile_context>
chip_gen: v7x
topology: tpu7x:2x2x1
jax: 0.10.0
libtpu: 0.0.40
codegen_flags: <defaults>
</compile_context>

<pallas_src>
import jax
import jax.numpy as jnp
from jax.experimental import pallas as pl
from jax.experimental.pallas import tpu as pltpu


def _selector_kernel(x_ref, lg_ref, sx_ref, saug_ref):
    """Batched-block kernel.

    x_ref    : (Bb, S, C)        feature tokens (native dtype)
    lg_ref   : (Bb, S, NC)       per-token class logits (native dtype)
    sx_ref   : (Bb, ns_pad, C)   top-num_select tokens sorted by descending confidence
    saug_ref : (Bb, S, NC_pad)   lane-dense slab: [sorted logits | sorted conf | zero pad]
    """
    x = x_ref[...]                              # [Bb, S, C]   (native dtype)
    lg = lg_ref[...]                            # [Bb, S, NC]  (native dtype)
    Bb, S, NC = lg.shape
    ns_pad = sx_ref.shape[1]
    NC_pad = saug_ref.shape[-1]

    lg32 = lg.astype(jnp.float32)

    # ---- selected-class softmax score (full [S, NC] probs never normalized) ---
    m = jnp.max(lg32, axis=-1, keepdims=True)             # [Bb, S, 1]
    e = jnp.exp(lg32 - m)                                  # [Bb, S, NC]
    denom = jnp.sum(e, axis=-1, keepdims=True)             # [Bb, S, 1]

    # ---- max_ids = argmax(softmax(logits.mean(1)))  (softmax is monotone) -----
    mean_lg = jnp.mean(lg32, axis=1, keepdims=True)        # [Bb, 1, NC]
    mmax = jnp.max(mean_lg, axis=-1, keepdims=True)        # [Bb, 1, 1]
    nc_iota = jax.lax.broadcasted_iota(jnp.int32, (Bb, 1, NC), 2)
    masked = jnp.where(mean_lg == mmax, nc_iota, NC)       # first-max tie-break
    max_id = jnp.min(masked, axis=-1, keepdims=True)       # [Bb, 1, 1]
    onehot = (nc_iota == max_id).astype(jnp.float32)       # [Bb, 1, NC]

    e_sel = jnp.sum(e * onehot, axis=-1, keepdims=True)    # [Bb, S, 1]
    scores = e_sel / denom                                  # exact softmax column
    scores_row = jnp.transpose(scores, (0, 2, 1))           # [Bb, 1, S]

    # ---- descending argsort via rank counting (stable tie-break on index) -----
    # Axis-1 iota is computed ONCE and reused both as the row index for the
    # tie-break (one-shot path) and as the position index when building P.
    row_iota = jax.lax.broadcasted_iota(jnp.int32, (Bb, S, S), 1)

    chunk = 0
    if S > 512:
        for cand in (512, 256, 128):
            if S % cand == 0:
                chunk = cand
                break
    # TODO(synk): for huge S that is not a multiple of 128 the one-shot path still
    # materializes [Bb,S,S] compare temporaries; add a masked remainder chunk and
    # column-chunk the permutation matmuls themselves if that regime matters.

    if chunk:
        # Column-chunked rank count: only chunk-wide compare temps live at once.
        n_chunks = S // chunk
        ci = jax.lax.broadcasted_iota(jnp.int32, (Bb, S, chunk), 1)
        cj = jax.lax.broadcasted_iota(jnp.int32, (Bb, S, chunk), 2)
        pos = jnp.zeros((Bb, S, 1), jnp.int32)
        for c in range(n_chunks):   # static unroll; chunk temps die after each add
            sc_c = scores_row[:, :, c * chunk:(c + 1) * chunk]    # [Bb,1,chunk]
            gt = sc_c > scores
            tie = (sc_c == scores) & (cj + c * chunk < ci)
            pos = pos + jnp.sum((gt | tie).astype(jnp.int32), axis=-1, keepdims=True)
    else:
        j_iota = jax.lax.broadcasted_iota(jnp.int32, (Bb, S, S), 2)
        gt = scores_row > scores                            # [Bb,S,S]: s[j] > s[i]
        tie = (scores_row == scores) & (j_iota < row_iota)
        pos = jnp.sum((gt | tie).astype(jnp.int32),
                      axis=-1, keepdims=True)               # [Bb, S, 1]

    # permutation: P[b, p, i] = 1 iff token i lands at sorted position p
    P = row_iota == jnp.transpose(pos, (0, 2, 1))           # bool [Bb, S, S]
    P_lg = P.astype(lg.dtype)                               # cast once
    if x.dtype == lg.dtype:
        P_x_top = P_lg[:, :ns_pad, :]                       # reuse the cast
    else:
        P_x_top = P[:, :ns_pad, :].astype(x.dtype)

    # ---- gather rows with permutation matmuls in native dtypes (MXU) ----------
    # Only the top num_select (padded to a sublane multiple) rows of x are
    # gathered; the drop half of sorted x is never used by the module.
    sx = jnp.einsum('bps,bsc->bpc', P_x_top, x,
                    preferred_element_type=jnp.float32)
    sx_ref[...] = sx.astype(sx_ref.dtype)

    # lane-dense augmented slab: [logits | conf | zero pad] -> single matmul + store
    pad = NC_pad - NC - 1
    parts = [lg, scores.astype(lg.dtype)]
    if pad > 0:
        parts.append(jnp.zeros((Bb, S, pad), dtype=lg.dtype))
    aug = jnp.concatenate(parts, axis=-1)                   # [Bb, S, NC_pad]
    saug = jnp.einsum('bps,bsc->bpc', P_lg, aug,
                      preferred_element_type=jnp.float32)
    saug_ref[...] = saug.astype(saug_ref.dtype)


def _round_up(v, m):
    return ((v + m - 1) // m) * m


def _vmem_limit_bytes():
    """Generation-aware VMEM limit: ~75% of the per-core capacity, capped at 96 MiB.

    v7x (64 MiB physical)  -> 48 MiB;  v5e/v6e (128 MiB physical) -> 96 MiB.
    """
    cap = 128 * 1024 * 1024
    try:
        info = pltpu.get_tpu_info()
        cap = int(getattr(info, "vmem_capacity_bytes", cap))
    except Exception:
        pass
    return int(min(cap - cap // 4, 96 * 1024 * 1024))


def _pick_batch_block(B, S, C, NC, NC_pad, ns_pad, x_isize, lg_isize, budget_bytes):
    """Largest batch-block fitting a VMEM budget, then shrunk so there are
    >= min(B, 4) grid steps (megacore sharding + pipeline overlap)."""
    S_l = _round_up(S, 128)
    NC_l = _round_up(NC, 128)
    C_l = _round_up(C, 128)
    # double-buffered I/O blocks (BlockSpec pipeline keeps 2 of each)
    io = 2 * (S * C_l * x_isize            # x in
              + S * NC_l * lg_isize        # logits in
              + ns_pad * C_l * x_isize     # sorted-x (top ns) out
              + S * NC_pad * lg_isize)     # [logits|conf|pad] slab out
    # in-kernel temporaries: [S,S] sort/permutation live set + softmax + matmul results
    tmp = 4 * (6 * S * S_l
               + 2 * S * NC_l
               + ns_pad * C_l
               + S * NC_pad)
    per_b = max(1, io + tmp)
    cap = max(1, budget_bytes // per_b)
    cap = min(cap, B)
    target_steps = min(B, 4)
    bb = max(1, min(cap, -(-B // target_steps)))
    return bb


def _sorted_by_top_class(xs, lg, ns):
    """Run the Pallas kernel over the batch.

    Returns (sorted_x_top [B, ns, C], sorted_logits [B, S, NC], sorted_conf [B, S])."""
    B, S, C = xs.shape
    NC = lg.shape[-1]
    NC_pad = _round_up(NC + 1, 128)
    ns_pad = min(_round_up(max(ns, 1), 8), S)

    limit = _vmem_limit_bytes()
    Bb = _pick_batch_block(B, S, C, NC, NC_pad, ns_pad,
                           xs.dtype.itemsize, lg.dtype.itemsize, limit // 2)
    steps = -(-B // Bb)
    if steps > 1 and steps % 2 == 1:
        steps += 1                      # even step count balances v7x's 2 TensorCores
    B_pad = steps * Bb
    if B_pad != B:
        xs = jnp.pad(xs, ((0, B_pad - B), (0, 0), (0, 0)))
        lg = jnp.pad(lg, ((0, B_pad - B), (0, 0), (0, 0)))

    sx, saug = pl.pallas_call(
        _selector_kernel,
        out_shape=(
            jax.ShapeDtypeStruct((B_pad, ns_pad, C), xs.dtype),
            jax.ShapeDtypeStruct((B_pad, S, NC_pad), lg.dtype),
        ),
        grid_spec=pltpu.PrefetchScalarGridSpec(
            num_scalar_prefetch=0,
            grid=(steps,),
            in_specs=[
                pl.BlockSpec((Bb, S, C), lambda b: (b, 0, 0)),
                pl.BlockSpec((Bb, S, NC), lambda b: (b, 0, 0)),
            ],
            out_specs=(
                pl.BlockSpec((Bb, ns_pad, C), lambda b: (b, 0, 0)),
                pl.BlockSpec((Bb, S, NC_pad), lambda b: (b, 0, 0)),
            ),
        ),
        compiler_params=pltpu.CompilerParams(
            dimension_semantics=("parallel",),
            vmem_limit_bytes=limit,
        ),
    )(xs, lg)

    sorted_x_top = sx[:B, :ns, :]        # [B, ns, C]
    sorted_logits = saug[:B, :, :NC]     # [B, S, NC]
    sorted_conf = saug[:B, :, NC]        # [B, S]
    return sorted_x_top, sorted_logits, sorted_conf


def selector_forward(x, logits, num_select):
    """JAX/Pallas equivalent of Selector.forward.

    Returns (selections, logits_out, thresholds):
      selections[name]            : [B, num_select, C]
      logits_out['select_'+name]  : [B, num_select, NC]
      logits_out['drop_'+name]    : [B, S - num_select, NC]
      thresholds[name]            : [B]  (conf of the first dropped token, as the module records)
    """
    selections = {}
    logits_out = dict(logits)
    thresholds = {}
    for name in x:
        if 'FPN1_' in name:
            continue
        xs = x[name]
        lg = logits[name]
        ns = num_select[name]
        sorted_x_top, sorted_logits, sorted_conf = _sorted_by_top_class(xs, lg, ns)
        selections[name] = sorted_x_top
        logits_out['select_' + name] = sorted_logits[:, :ns, :]
        logits_out['drop_' + name] = sorted_logits[:, ns:, :]
        # TODO(synk): module mutates self.thresholds (python-side state); returned here instead.
        thresholds[name] = sorted_conf[:, ns]
    return selections, logits_out, thresholds


def _reference_forward(x, logits, num_select):
    """Pure-JAX reference mirroring the PyTorch loop."""
    selections = {}
    logits_out = dict(logits)
    thresholds = {}
    for name in x:
        if 'FPN1_' in name:
            continue
        xs, lg, ns = x[name], logits[name], num_select[name]
        probs = jax.nn.softmax(lg, axis=-1)
        sum_probs = jax.nn.softmax(lg.mean(axis=1), axis=-1)
        sel, p1, p0, th = [], [], [], []
        for bi in range(lg.shape[0]):
            max_id = jnp.argmax(sum_probs[bi])
            sc = probs[bi, :, max_id]
            ranks = jnp.argsort(-sc)  # stable -> same tie-break as kernel
            sel.append(xs[bi][ranks[:ns]])
            p1.append(lg[bi][ranks[:ns]])
            p0.append(lg[bi][ranks[ns:]])
            th.append(sc[ranks[ns]])
        selections[name] = jnp.stack(sel)
        logits_out['select_' + name] = jnp.stack(p1)
        logits_out['drop_' + name] = jnp.stack(p0)
        thresholds[name] = jnp.stack(th)
    return selections, logits_out, thresholds


if __name__ == "__main__":
    B, S, C, NC = 2, 8, 32, 16          # batch, tokens (HxW), feature dim, num_classes
    num_select = {"layer3": 4, "layer4": 3}

    key = jax.random.PRNGKey(0)
    k1, k2, k3, k4, k5 = jax.random.split(key, 5)
    x = {
        "layer3": jax.random.normal(k1, (B, S, C), dtype=jnp.float32),
        "layer4": jax.random.normal(k2, (B, S, C), dtype=jnp.float32),
        "FPN1_layer3": jax.random.normal(k5, (B, S, C), dtype=jnp.float32),  # skipped
    }
    logits = {
        "layer3": jax.random.normal(k3, (B, S, NC), dtype=jnp.float32),
        "layer4": jax.random.normal(k4, (B, S, NC), dtype=jnp.float32),
    }

    selections, logits_out, thresholds = selector_forward(x, logits, num_select)
    jax.block_until_ready(selections)

    ref_sel, ref_logits, ref_th = _reference_forward(x, logits, num_select)
    for name in num_select:
        assert jnp.allclose(selections[name], ref_sel[name], atol=1e-5), name
        assert jnp.allclose(logits_out['select_' + name], ref_logits['select_' + name], atol=1e-5), name
        assert jnp.allclose(logits_out['drop_' + name], ref_logits['drop_' + name], atol=1e-5), name
        assert jnp.allclose(thresholds[name], ref_th[name], atol=1e-5), name
    assert "FPN1_layer3" not in selections

    print("KERNEL_OK")
</pallas_src>

<mosaic_0001>
module attributes {stable_mosaic.version = 11 : i64} {
  func.func @_selector_kernel(%arg0: i32, %arg1: memref<1x8x32xf32, #tpu.memory_space<vmem>>, %arg2: memref<1x8x16xf32, #tpu.memory_space<vmem>>, %arg3: memref<1x8x32xf32, #tpu.memory_space<vmem>>, %arg4: memref<1x8x128xf32, #tpu.memory_space<vmem>>) attributes {dimension_semantics = [#tpu.dimension_semantics<parallel>], iteration_bounds = array<i64: 2>, scalar_prefetch = 0 : i64, scratch_operands = 0 : i64, tpu.core_type = #tpu.core_type<tc>, window_params = [{transform_indices = @transform_0, window_bounds = array<i64: 1, 8, 32>}, {transform_indices = @transform_1, window_bounds = array<i64: 1, 8, 16>}, {transform_indices = @transform_2, window_bounds = array<i64: 1, 8, 32>}, {transform_indices = @transform_3, window_bounds = array<i64: 1, 8, 128>}]} {
    %c0 = arith.constant 0 : index
    %c0_0 = arith.constant 0 : index
    %c0_1 = arith.constant 0 : index
    %0 = vector.load %arg1[%c0, %c0_0, %c0_1] : memref<1x8x32xf32, #tpu.memory_space<vmem>>, vector<1x8x32xf32>
    %c0_2 = arith.constant 0 : index
    %c0_3 = arith.constant 0 : index
    %c0_4 = arith.constant 0 : index
    %1 = vector.load %arg2[%c0_2, %c0_3, %c0_4] : memref<1x8x16xf32, #tpu.memory_space<vmem>>, vector<1x8x16xf32>
    %cst = arith.constant dense<0xFF800000> : vector<1x8xf32>
    %2 = vector.multi_reduction <maximumf>, %1, %cst [2] : vector<1x8x16xf32> to vector<1x8xf32>
    %3 = vector.shape_cast %2 : vector<1x8xf32> to vector<1x8x1xf32>
    %4 = vector.broadcast %3 : vector<1x8x1xf32> to vector<1x8x16xf32>
    %5 = arith.subf %1, %4 : vector<1x8x16xf32>
    %6 = math.exp %5 : vector<1x8x16xf32>
    %cst_5 = arith.constant dense<0.000000e+00> : vector<1x8xf32>
    %7 = vector.multi_reduction <add>, %6, %cst_5 [2] : vector<1x8x16xf32> to vector<1x8xf32>
    %8 = vector.shape_cast %7 : vector<1x8xf32> to vector<1x8x1xf32>
    %cst_6 = arith.constant dense<0.000000e+00> : vector<1x16xf32>
    %9 = vector.multi_reduction <add>, %1, %cst_6 [1] : vector<1x8x16xf32> to vector<1x16xf32>
    %10 = vector.shape_cast %9 : vector<1x16xf32> to vector<1x1x16xf32>
    %cst_7 = arith.constant 8.000000e+00 : f32
    %11 = vector.broadcast %cst_7 : f32 to vector<1x1x16xf32>
    %12 = arith.divf %10, %11 : vector<1x1x16xf32>
    %cst_8 = arith.constant dense<0xFF800000> : vector<1x1xf32>
    %13 = vector.multi_reduction <maximumf>, %12, %cst_8 [2] : vector<1x1x16xf32> to vector<1x1xf32>
    %14 = vector.shape_cast %13 : vector<1x1xf32> to vector<1x1x1xf32>
    %15 = tpu.iota {dimensions = array<i32: 2>} : vector<1x1x16xi32>
    %16 = vector.broadcast %14 : vector<1x1x1xf32> to vector<1x1x16xf32>
    %17 = arith.cmpf oeq, %12, %16 : vector<1x1x16xf32>
    %c16_i32 = arith.constant 16 : i32
    %18 = vector.broadcast %c16_i32 : i32 to vector<1x1x16xi32>
    %19 = arith.select %17, %15, %18 : vector<1x1x16xi1>, vector<1x1x16xi32>
    %cst_9 = arith.constant dense<2147483647> : vector<1x1xi32>
    %20 = vector.multi_reduction <minsi>, %19, %cst_9 [2] : vector<1x1x16xi32> to vector<1x1xi32>
    %21 = vector.shape_cast %20 : vector<1x1xi32> to vector<1x1x1xi32>
    %22 = vector.broadcast %21 : vector<1x1x1xi32> to vector<1x1x16xi32>
    %23 = arith.cmpi eq, %15, %22 : vector<1x1x16xi32>
    %24 = arith.extui %23 : vector<1x1x16xi1> to vector<1x1x16xi32>
    %25 = arith.sitofp %24 : vector<1x1x16xi32> to vector<1x1x16xf32>
    %26 = vector.broadcast %25 : vector<1x1x16xf32> to vector<1x8x16xf32>
    %27 = arith.mulf %6, %26 : vector<1x8x16xf32>
    %cst_10 = arith.constant dense<0.000000e+00> : vector<1x8xf32>
    %28 = vector.multi_reduction <add>, %27, %cst_10 [2] : vector<1x8x16xf32> to vector<1x8xf32>
    %29 = vector.shape_cast %28 : vector<1x8xf32> to vector<1x8x1xf32>
    %30 = arith.divf %29, %8 : vector<1x8x1xf32>
    %31 = tpu.transpose %30, [0, 2, 1] : vector<1x8x1xf32> -> vector<1x1x8xf32>
    %32 = tpu.iota {dimensions = array<i32: 1>} : vector<1x8x8xi32>
    %33 = tpu.iota {dimensions = array<i32: 2>} : vector<1x8x8xi32>
    %34 = vector.broadcast %31 : vector<1x1x8xf32> to vector<1x8x8xf32>
    %35 = vector.broadcast %30 : vector<1x8x1xf32> to vector<1x8x8xf32>
    %36 = arith.cmpf ogt, %34, %35 : vector<1x8x8xf32>
    %37 = vector.broadcast %31 : vector<1x1x8xf32> to vector<1x8x8xf32>
    %38 = vector.broadcast %30 : vector<1x8x1xf32> to vector<1x8x8xf32>
    %39 = arith.cmpf oeq, %37, %38 : vector<1x8x8xf32>
    %40 = arith.cmpi slt, %33, %32 : vector<1x8x8xi32>
    %41 = arith.andi %39, %40 : vector<1x8x8xi1>
    %42 = arith.ori %36, %41 : vector<1x8x8xi1>
    %43 = arith.extui %42 : vector<1x8x8xi1> to vector<1x8x8xi32>
    %cst_11 = arith.constant dense<0> : vector<1x8xi32>
    %44 = vector.multi_reduction <add>, %43, %cst_11 [2] : vector<1x8x8xi32> to vector<1x8xi32>
    %45 = vector.shape_cast %44 : vector<1x8xi32> to vector<1x8x1xi32>
    %46 = tpu.transpose %45, [0, 2, 1] : vector<1x8x1xi32> -> vector<1x1x8xi32>
    %47 = vector.broadcast %46 : vector<1x1x8xi32> to vector<1x8x8xi32>
    %48 = arith.cmpi eq, %32, %47 : vector<1x8x8xi32>
    %49 = arith.extui %48 : vector<1x8x8xi1> to vector<1x8x8xi32>
    %50 = arith.sitofp %49 : vector<1x8x8xi32> to vector<1x8x8xf32>
    "tpu.trace_start"() <{level = 10 : i32, message = "bps,bsc->bpc"}> : () -> ()
    %cst_12 = arith.constant dense<0.000000e+00> : vector<1x8x32xf32>
    %51 = tpu.matmul %50, %0, %cst_12 {dimension_numbers = #tpu.dot_dimension_numbers<[2], [1], [1], [2], [0, 0, 0, 1, 1, 2], [0], [0]>} : vector<1x8x8xf32>, vector<1x8x32xf32>, vector<1x8x32xf32> -> vector<1x8x32xf32>
    "tpu.trace_stop"() : () -> ()
    %c0_13 = arith.constant 0 : index
    %c0_14 = arith.constant 0 : index
    %c0_15 = arith.constant 0 : index
    %52 = vector.load %arg3[%c0_13, %c0_14, %c0_15] : memref<1x8x32xf32, #tpu.memory_space<vmem>>, vector<1x8x32xf32>
    tpu.vector_store %arg3[%c0_13, %c0_14, %c0_15], %51 {strides = array<i32>} : memref<1x8x32xf32, #tpu.memory_space<vmem>>, vector<1x8x32xf32>,
    %cst_16 = arith.constant 0.000000e+00 : f32
    %53 = vector.broadcast %cst_16 : f32 to vector<1x8x111xf32>
    %54 = tpu.concatenate %1, %30, %53 in 2 : vector<1x8x16xf32>, vector<1x8x1xf32>, vector<1x8x111xf32> -> vector<1x8x128xf32>
    "tpu.trace_start"() <{level = 10 : i32, message = "bps,bsc->bpc"}> : () -> ()
    %cst_17 = arith.constant dense<0.000000e+00> : vector<1x8x128xf32>
    %55 = tpu.matmul %50, %54, %cst_17 {dimension_numbers = #tpu.dot_dimension_numbers<[2], [1], [1], [2], [0, 0, 0, 1, 1, 2], [0], [0]>} : vector<1x8x8xf32>, vector<1x8x128xf32>, vector<1x8x128xf32> -> vector<1x8x128xf32>
    "tpu.trace_stop"() : () -> ()
    %c0_18 = arith.constant 0 : index
    %c0_19 = arith.constant 0 : index
    %c0_20 = arith.constant 0 : index
    %56 = vector.load %arg4[%c0_18, %c0_19, %c0_20] : memref<1x8x128xf32, #tpu.memory_space<vmem>>, vector<1x8x128xf32>
    tpu.vector_store %arg4[%c0_18, %c0_19, %c0_20], %55 {strides = array<i32>} : memref<1x8x128xf32, #tpu.memory_space<vmem>>, vector<1x8x128xf32>,
    return
  }
  func.func @transform_0(%arg0: i32) -> (i32, i32, i32) {
    %c0_i32 = arith.constant 0 : i32
    %c0_i32_0 = arith.constant 0 : i32
    %c0_i32_1 = arith.constant 0 : i32
    return %arg0, %c0_i32, %c0_i32_0 : i32, i32, i32
  }
  func.func @transform_1(%arg0: i32) -> (i32, i32, i32) {
    %c0_i32 = arith.constant 0 : i32
    %c0_i32_0 = arith.constant 0 : i32
    %c0_i32_1 = arith.constant 0 : i32
    return %arg0, %c0_i32, %c0_i32_0 : i32, i32, i32
  }
  func.func @transform_2(%arg0: i32) -> (i32, i32, i32) {
    %c0_i32 = arith.constant 0 : i32
    %c0_i32_0 = arith.constant 0 : i32
    %c0_i32_1 = arith.constant 0 : i32
    return %arg0, %c0_i32, %c0_i32_0 : i32, i32, i32
  }
  func.func @transform_3(%arg0: i32) -> (i32, i32, i32) {
    %c0_i32 = arith.constant 0 : i32
    %c0_i32_0 = arith.constant 0 : i32
    %c0_i32_1 = arith.constant 0 : i32
    return %arg0, %c0_i32, %c0_i32_0 : i32, i32, i32
  }
}

</mosaic_0001>

<llo_original>
// kernel: tpu_custom_call.1
$region0: #{tpu_custom_call.1}
  #allocation0 [shape = 'u32[]', space=smem, size = 0x4, offset = 0x4, fixed_abs, tag = 'smem constant byte address 0x4 - core index']
  #allocation1 [shape = 'u32[144,128]{1,0:T(1,128)}', space=vmem, size = 0x12000, scoped, tag = 'internal scratch']
  %s0 = inlined_call_operand.hbm [shape: f32[2,8,32], index: 0, kind: input, shape index: {}]
  %s1 = inlined_call_operand.hbm [shape: f32[2,8,16], index: 1, kind: input, shape index: {}]
  %s2 = inlined_call_operand.hbm [shape: f32[2,8,32], index: 2, kind: output, shape index: {0}]
  %s3 = inlined_call_operand.hbm [shape: f32[2,8,128], index: 3, kind: output, shape index: {1}]
  %4 = xla_tuple %s2, %s3
  %s5 = sld [smem:[#allocation0]]
  $region57: #{tpu_custom_call.1} parent=0
    _
  %s7 = ssub.s32 1, %s5
  %s8 = scalar_select 0, %s7, %s5
  $region1: #{tpu_custom_call.1} parent=0
    #allocation2 [shape = 'u8[8192]{0}', space=vmem, size = 0x2000, scoped, tag = 'input window, operand 0']
    #allocation3 [shape = 's32[2]{0}', space=sflag, size = 0x8, scoped, tag = 'scoped memory for tpu_custom_call.1']
    #allocation4 [shape = 's32[2]{0}', space=sflag, size = 0x8, scoped, tag = 'scoped memory for tpu_custom_call.1']
    #allocation5 [shape = 'u8[8192]{0}', space=vmem, size = 0x2000, scoped, tag = 'input window, operand 1']
    #allocation6 [shape = 's32[2]{0}', space=sflag, size = 0x8, scoped, tag = 'scoped memory for tpu_custom_call.1']
    #allocation7 [shape = 'u8[8192]{0}', space=vmem, size = 0x2000, scoped, tag = 'output window, operand 0']
    #allocation8 [shape = 'u8[8192]{0}', space=vmem, size = 0x2000, scoped, tag = 'output window, operand 1']
    #allocation9 [shape = 's32[2]{0}', space=sflag, size = 0x8, scoped, tag = 'scoped memory for tpu_custom_call.1']
    %9 = vsyncpa [#allocation3], 0
    %s10 = scalar_lea.sflag [#allocation3], 1
    %11 = vsyncpa %s10, 0
    %12 = vsyncpa [#allocation6], 0
    %s13 = scalar_lea.sflag [#allocation6], 1
    %14 = vsyncpa %s13, 0
    %15 = vsyncpa [#allocation4], 0
    %s16 = scalar_lea.sflag [#allocation4], 1
    %17 = vsyncpa %s16, 0
    %18 = vsyncpa [#allocation9], 0
    %s19 = scalar_lea.sflag [#allocation9], 1
    %20 = vsyncpa %s19, 0
    loop: start=0, step=1, limit=4
    $region2: #{tpu_custom_call.1} parent=1 // loop_pre_header
      _
    $region3: #{tpu_custom_call.1} parent=1 // loop_header
      %s22 = sphi 0, %s26
      %p23 = scmp.ge.s32.totalorder %s22, 4
      %s32 = sphi 0, %s34
      %s35 = sphi 0, %s32
      %s36 = sphi 0, %s35
      %s52 = sphi 0, %s36
      %s58 = sphi 0, %s60
      %s61 = sphi 0, %s58
      %s62 = sphi 0, %s61
      %s78 = sphi 0, %s62
      %s84 = sphi 0, %s86
      %s87 = sphi 0, %s84
      %s88 = sphi 0, %s87
      %s104 = sphi 0, %s88
      %s110 = sphi 0, %s112
      %s113 = sphi 0, %s110
      %s114 = sphi 0, %s113
      %s130 = sphi 0, %s114
    $region4: #{tpu_custom_call.1} parent=1 // loop_header_branch
      %25 = sbr.rel (%p23) target = $region8
    $region5: #{tpu_custom_call.1} parent=1 // loop_body
      %s27 = ssub.s32 %s22, 1
      %s28 = ssub.s32 %s22, 2
      %s29 = sadd.s32 %s22, 1
      %s30 = ssub.s32 %s22, %s29
      %p31 = scmp.eq.s32.totalorder %s30, 0
      %s33 = sadd.s32 %s32, 1
      %s34 = scalar_select %p31, %s32, %s33
      %p37 = pneg %p31
      %p38 = scmp.eq.s32.totalorder %s22, 1
      %p39 = por %p37, %p38
      %p40 = scmp.ne.s32.totalorder %s32, %s35
      %p41 = scmp.eq.s32.totalorder %s22, 0
      %p42 = por %p40, %p41
      %p43 = scmp.ne.s32.totalorder %s32, %s35
      %p44 = scmp.eq.s32.totalorder %s27, 1
      %p45 = por %p43, %p44
      %p46 = scmp.ne.s32.totalorder %s35, %s36
      %p47 = scmp.eq.s32.totalorder %s27, 0
      %p48 = por %p46, %p47
      %p49 = scmp.ne.s32.totalorder %s35, %s36
      %p50 = scmp.eq.s32.totalorder %s28, 1
      %p51 = por %p49, %p50
      %p53 = scmp.ne.s32.totalorder %s36, %s52
      %p54 = scmp.eq.s32.totalorder %s28, 0
      %p55 = por %p53, %p54
      %s56 = ssub.s32 %s22, %s29
      %p57 = scmp.eq.s32.totalorder %s56, 0
      %s59 = sadd.s32 %s58, 1
      %s60 = scalar_select %p57, %s58, %s59
      %p63 = pneg %p57
      %p64 = scmp.eq.s32.totalorder %s22, 1
      %p65 = por %p63, %p64
      %p66 = scmp.ne.s32.totalorder %s58, %s61
      %p67 = scmp.eq.s32.totalorder %s22, 0
      %p68 = por %p66, %p67
      %p69 = scmp.ne.s32.totalorder %s58, %s61
      %p70 = scmp.eq.s32.totalorder %s27, 1
      %p71 = por %p69, %p70
      %p72 = scmp.ne.s32.totalorder %s61, %s62
      %p73 = scmp.eq.s32.totalorder %s27, 0
      %p74 = por %p72, %p73
      %p75 = scmp.ne.s32.totalorder %s61, %s62
      %p76 = scmp.eq.s32.totalorder %s28, 1
      %p77 = por %p75, %p76
      %p79 = scmp.ne.s32.totalorder %s62, %s78
      %p80 = scmp.eq.s32.totalorder %s28, 0
      %p81 = por %p79, %p80
      %s82 = ssub.s32 %s22, %s29
      %p83 = scmp.eq.s32.totalorder %s82, 0
      %s85 = sadd.s32 %s84, 1
      %s86 = scalar_select %p83, %s84, %s85
      %p89 = pneg %p83
      %p90 = scmp.eq.s32.totalorder %s22, 1
      %p91 = por %p89, %p90
      %p92 = scmp.ne.s32.totalorder %s84, %s87
      %p93 = scmp.eq.s32.totalorder %s22, 0
      %p94 = por %p92, %p93
      %p95 = scmp.ne.s32.totalorder %s84, %s87
      %p96 = scmp.eq.s32.totalorder %s27, 1
      %p97 = por %p95, %p96
      %p98 = scmp.ne.s32.totalorder %s87, %s88
      %p99 = scmp.eq.s32.totalorder %s27, 0
      %p100 = por %p98, %p99
      %p101 = scmp.ne.s32.totalorder %s87, %s88
      %p102 = scmp.eq.s32.totalorder %s28, 1
      %p103 = por %p101, %p102
      %p105 = scmp.ne.s32.totalorder %s88, %s104
      %p106 = scmp.eq.s32.totalorder %s28, 0
      %p107 = por %p105, %p106
      %s108 = ssub.s32 %s22, %s29
      %p109 = scmp.eq.s32.totalorder %s108, 0
      %s111 = sadd.s32 %s110, 1
      %s112 = scalar_select %p109, %s110, %s111
      %p115 = pneg %p109
      %p116 = scmp.eq.s32.totalorder %s22, 1
      %p117 = por %p115, %p116
      %p118 = scmp.ne.s32.totalorder %s110, %s113
      %p119 = scmp.eq.s32.totalorder %s22, 0
      %p120 = por %p118, %p119
      %p121 = scmp.ne.s32.totalorder %s110, %s113
      %p122 = scmp.eq.s32.totalorder %s27, 1
      %p123 = por %p121, %p122
      %p124 = scmp.ne.s32.totalorder %s113, %s114
      %p125 = scmp.eq.s32.totalorder %s27, 0
      %p126 = por %p124, %p125
      %p127 = scmp.ne.s32.totalorder %s113, %s114
      %p128 = scmp.eq.s32.totalorder %s28, 1
      %p129 = por %p127, %p128
      %p131 = scmp.ne.s32.totalorder %s114, %s130
      %p132 = scmp.eq.s32.totalorder %s28, 0
      %p133 = por %p131, %p132
      %p134 = scmp.le.s32.totalorder 1, %s22
      %p135 = scmp.lt.s32.totalorder %s22, 3
      %p136 = pnand %p134, %p135
      %p137 = pneg %p136
      // Predicated region
      $region9: #{tpu_custom_call.1} parent=5 // pred_check
        _
      $region10: #{tpu_custom_call.1} parent=5 // pred_check_branch
        %139 = sbr.rel (%p136) target = $region12
      $region11: #{tpu_custom_call.1} parent=5 // pred_region
        %s140 = ssub.s32 %s22, 1
      $region12: #{tpu_custom_call.1} parent=5 // pred_fallthru
        _
      %p141 = scmp.lt.s32.totalorder %s22, 2
      // Predicated region
      $region13: #{tpu_custom_call.1} parent=5 // pred_check
        %p142 = pneg %p141
      $region14: #{tpu_custom_call.1} parent=5 // pred_check_branch
        %144 = sbr.rel (%p142) target = $region16
      $region15: #{tpu_custom_call.1} parent=5 // pred_region
        // Predicated region
        $region17: #{tpu_custom_call.1} parent=15 // pred_check
          %p145 = pneg %p42
        $region18: #{tpu_custom_call.1} parent=15 // pred_check_branch
          %147 = sbr.rel (%p145) target = $region20
        $region19: #{tpu_custom_call.1} parent=15 // pred_region
          %s148 = sand.u32 %s32, 1
          %s149 = scalar_lea.sflag [#allocation3], %s148
          %s150 = sand.u32 %s32, 1
          %s151 = smul.addr %s150, 8
          %s152 = scalar_lea.vmem [#allocation2], %s151
          %s154 = ssub.s32 128, 128
          %155 = vsyncadd %s149, %s154
          %s156 = smul.addr %s22, 128
          %s157 = scalar_lea.hbm %s0, %s156
          %s159 = sshll.u32 %s152, 4
          %s160 = int_to_ptr.vmem [resolvable:$true] %s159
          %162 = dma.hbm_to_vmem [thread:$0]  %s157, 128, %s160, %s149
        $region20: #{tpu_custom_call.1} parent=15 // pred_fallthru
          _
        // Predicated region
        $region21: #{tpu_custom_call.1} parent=15 // pred_check
          %p163 = pneg %p68
        $region22: #{tpu_custom_call.1} parent=15 // pred_check_branch
          %165 = sbr.rel (%p163) target = $region24
        $region23: #{tpu_custom_call.1} parent=15 // pred_region
          %s166 = sand.u32 %s58, 1
          %s167 = scalar_lea.sflag [#allocation6], %s166
          %s168 = sand.u32 %s58, 1
          %s169 = smul.addr %s168, 8
          %s170 = scalar_lea.vmem [#allocation5], %s169
          %s172 = ssub.s32 128, 128
          %173 = vsyncadd %s167, %s172
          %s174 = smul.addr %s22, 128
          %s175 = scalar_lea.hbm %s1, %s174
          %s177 = sshll.u32 %s170, 4
          %s178 = int_to_ptr.vmem [resolvable:$true] %s177
          %180 = dma.hbm_to_vmem [thread:$0]  %s175, 128, %s178, %s167
        $region24: #{tpu_custom_call.1} parent=15 // pred_fallthru
          _
      $region16: #{tpu_custom_call.1} parent=5 // pred_fallthru
        _
      %p181 = scmp.le.s32.totalorder 1, %s22
      %p182 = scmp.lt.s32.totalorder %s22, 3
      %p183 = pnand %p181, %p182
      %p184 = pneg %p183
      // Predicated region
      $region25: #{tpu_custom_call.1} parent=5 // pred_check
        _
      $region26: #{tpu_custom_call.1} parent=5 // pred_check_branch
        %186 = sbr.rel (%p183) target = $region28
      $region27: #{tpu_custom_call.1} parent=5 // pred_region
        %s187 = ssub.s32 %s22, 1
        %s188 = sand.u32 %s35, 1
        %s189 = scalar_lea.sflag [#allocation3], %s188
        %s190 = sand.u32 %s35, 1
        %s191 = smul.addr %s190, 8
        %s192 = scalar_lea.vmem [#allocation2], %s191
        // Predicated region
        $region29: #{tpu_custom_call.1} parent=27 // pred_check
          %p193 = pneg %p48
        $region30: #{tpu_custom_call.1} parent=27 // pred_check_branch
          %195 = sbr.rel (%p193) target = $region32
        $region31: #{tpu_custom_call.1} parent=27 // pred_region
          %196 = dma.done %s189, 128
        $region32: #{tpu_custom_call.1} parent=27 // pred_fallthru
          _
        %s197 = sand.u32 %s61, 1
        %s198 = scalar_lea.sflag [#allocation6], %s197
        %s199 = sand.u32 %s61, 1
        %s200 = smul.addr %s199, 8
        %s201 = scalar_lea.vmem [#allocation5], %s200
        // Predicated region
        $region33: #{tpu_custom_call.1} parent=27 // pred_check
          %p202 = pneg %p74
        $region34: #{tpu_custom_call.1} parent=27 // pred_check_branch
          %204 = sbr.rel (%p202) target = $region36
        $region35: #{tpu_custom_call.1} parent=27 // pred_region
          %205 = dma.done %s198, 128
        $region36: #{tpu_custom_call.1} parent=27 // pred_fallthru
          _
        %s206 = sand.u32 %s35, 1
        %s207 = scalar_lea.sflag [#allocation3], %s206
        %s208 = sand.u32 %s35, 1
        %s209 = smul.addr %s208, 8
        %s210 = scalar_lea.vmem [#allocation2], %s209
        %p211 = pneg %p48
        %p212 = pneg %p45
        %s213 = sand.u32 %s61, 1
        %s214 = scalar_lea.sflag [#allocation6], %s213
        %s215 = sand.u32 %s61, 1
        %s216 = smul.addr %s215, 8
        %s217 = scalar_lea.vmem [#allocation5], %s216
        %p218 = pneg %p74
        %p219 = pneg %p71
        %p220 = pneg %p100
        %p221 = pneg %p97
        %s222 = sand.u32 %s87, 1
        %s223 = scalar_lea.sflag [#allocation4], %s222
        %s224 = sand.u32 %s87, 1
        %s225 = smul.addr %s224, 8
        %s226 = scalar_lea.vmem [#allocation7], %s225
        %p227 = pneg %p126
        %p228 = pneg %p123
        %s229 = sand.u32 %s113, 1
        %s230 = scalar_lea.sflag [#allocation9], %s229
        %s231 = sand.u32 %s113, 1
        %s232 = smul.addr %s231, 8
        %s233 = scalar_lea.vmem [#allocation8], %s232
        %v234 = vld [vmem:[%s192] sm:$0xff]
        %v235 = vld [vmem:[%s201] sm:$0xff]
        %vm236 = vcmask 130048
        %v237 = vsel %vm236, %v235, -inf
        %238 = vmax.xlane.f32.xlu0 %v237
        %v239 = vpop.xlane.xlu0 %238
        %v240 = vsub.f32 %v235, %v239
        %v241 = vmul.f32 %v240, 1.442695
        %v242 = vpow.pop %v241
        %v243 = vsel %vm236, %v242, 0.0
        %244 = vadd.xlane.f32.xlu0 %v243
        %v245 = vpop.xlane.xlu0 %244
        %v246 = vsel %vm236, %v235, 0.0
        %v247 = vrot.slane %v246, 4
        %v248 = vadd.f32 %v246, %v247
        %v249 = vrot.slane %v248, 2
        %v250 = vadd.f32 %v248, %v249
        %v251 = vrot.slane %v250, 1
        %v252 = vadd.f32 %v250, %v251
        %v253 = vrcp.pop 8.0
        %v254 = vmul.f32 %v252, %v253
        %v255 = vsel %vm236, %v254, -inf
        %256 = vmax.xlane.f32.xlu0 %v255
        %v257 = vpop.xlane.xlu0 %256
        %v258 = vlaneseq
        %v259 = vand.u32 %v258, 127
        %vm260 = vcmp.eq.f32.partialorder %v254, %v257
        %v261 = vsel %vm260, %v259, 16
        %v262 = vsel %vm236, %v261, 2147483647
        %v263 = vand.u32 %v262, 65535
        %v264 = vshra.s32 %v262, 16
        %v265 = vcvt.s32.f32 %v263
        %v266 = vcvt.s32.f32 %v264
        %267 = vmin.xlane.f32.xlu0 %v266
        %v268 = vpop.xlane.xlu0 %267
        %vm269 = vcmp.eq.f32.partialorder %v266, %v268
        %v270 = vsel %vm269, %v265, inf
        %271 = vmin.xlane.f32.xlu0 %v270
        %v272 = vpop.xlane.xlu0 %271
        %v273 = vcvt.f32.s32 %v272
        %v274 = vcvt.f32.s32 %v268
        %v275 = vshll.u32 %v274, 16
        %v276 = vadd.s32 %v275, %v273
        %vm277 = vcmp.eq.s32.totalorder %v259, %v276
        %v278 = vsel %vm277, 1, 0
        %v279 = vcvt.s32.f32 %v278
        %v280 = vmul.f32 %v242, %v279
        %v281 = vsel %vm236, %v280, 0.0
        %282 = vadd.xlane.f32.xlu0 %v281
        %v283 = vpop.xlane.xlu0 %282
        %v284 = vrcp.pop %v245
        %v285 = vmul.f32 %v283, %v284
        %286 = vxpose.xlu0.b32.start [1/16] %v285, 128
        %287 = vxpose.xlu0.b32.cont [2/16] 0.0, 128
        %288 = vxpose.xlu0.b32.cont [3/16] 0.0, 128
        %289 = vxpose.xlu0.b32.cont [4/16] 0.0, 128
        %290 = vxpose.xlu0.b32.cont [5/16] 0.0, 128
        %291 = vxpose.xlu0.b32.cont [6/16] 0.0, 128
        %292 = vxpose.xlu0.b32.cont [7/16] 0.0, 128
        %293 = vxpose.xlu0.b32.cont [8/16] 0.0, 128
        %294 = vxpose.xlu0.b32.cont [9/16] 0.0, 128
        %295 = vxpose.xlu0.b32.cont [10/16] 0.0, 128
        %296 = vxpose.xlu0.b32.cont [11/16] 0.0, 128
        %297 = vxpose.xlu0.b32.cont [12/16] 0.0, 128
        %298 = vxpose.xlu0.b32.cont [13/16] 0.0, 128
        %299 = vxpose.xlu0.b32.cont [14/16] 0.0, 128
        %300 = vxpose.xlu0.b32.cont [15/16] 0.0, 128
        %301 = vxpose.xlu0.b32.end [16/16] 0.0, 128
        %v302 = vpop.trf.xlu0
        %v303 = vpop.trf.xlu0
        %v304 = vpop.trf.xlu0
        %v305 = vpop.trf.xlu0
        %v306 = vpop.trf.xlu0
        %v307 = vpop.trf.xlu0
        %v308 = vpop.trf.xlu0
        %v309 = vpop.trf.xlu0
        %v310 = vpop.trf.xlu0
        %v311 = vpop.trf.xlu0
        %v312 = vpop.trf.xlu0
        %v313 = vpop.trf.xlu0
        %v314 = vpop.trf.xlu0
        %v315 = vpop.trf.xlu0
        %v316 = vpop.trf.xlu0
        %v317 = vpop.trf.xlu0
        %v318 = vlaneseq
        %v319 = vshrl.u32 %v318, 7
        %v320 = vlaneseq
        %v321 = vshrl.u32 %v320, 7
        %v322 = vsub.s32 0, %v321
        %v323 = vrot.slane %v302, %v322
        %vm324 = vcmp.gt.f32.partialorder %v323, %v285
        %vm325 = vcmp.eq.f32.partialorder %v323, %v285
        %vm326 = vcmp.lt.s32.totalorder %v259, %v319
        %vm327 = vmand %vm325, %vm326
        %vm328 = vmor %vm324, %vm327
        %v329 = vsel %vm328, 1, 0
        %vm330 = vcmask 64512
        %v331 = vsel %vm330, %v329, 0
        %v332 = vand.u32 %v331, 65535
        %v333 = vshrl.u32 %v331, 16
        %v334 = vcvt.s32.f32 %v332
        %v335 = vcvt.s32.f32 %v333
        %336 = vadd.xlane.f32.xlu0 %v334
        %v337 = vpop.xlane.xlu0 %336
        %338 = vadd.xlane.f32.xlu0 %v335
        %v339 = vpop.xlane.xlu0 %338
        %v340 = vcvt.f32.s32 %v337
        %v341 = vcvt.f32.s32 %v339
        %v342 = vshll.u32 %v341, 16
        %v343 = vadd.s32 %v342, %v340
        %344 = vxpose.xlu0.b32.start [1/16] %v343, 128
        %345 = vxpose.xlu0.b32.cont [2/16] 0, 128
        %346 = vxpose.xlu0.b32.cont [3/16] 0, 128
        %347 = vxpose.xlu0.b32.cont [4/16] 0, 128
        %348 = vxpose.xlu0.b32.cont [5/16] 0, 128
        %349 = vxpose.xlu0.b32.cont [6/16] 0, 128
        %350 = vxpose.xlu0.b32.cont [7/16] 0, 128
        %351 = vxpose.xlu0.b32.cont [8/16] 0, 128
        %352 = vxpose.xlu0.b32.cont [9/16] 0, 128
        %353 = vxpose.xlu0.b32.cont [10/16] 0, 128
        %354 = vxpose.xlu0.b32.cont [11/16] 0, 128
        %355 = vxpose.xlu0.b32.cont [12/16] 0, 128
        %356 = vxpose.xlu0.b32.cont [13/16] 0, 128
        %357 = vxpose.xlu0.b32.cont [14/16] 0, 128
        %358 = vxpose.xlu0.b32.cont [15/16] 0, 128
        %359 = vxpose.xlu0.b32.end [16/16] 0, 128
        %v360 = vpop.trf.xlu0
        %v361 = vpop.trf.xlu0
        %v362 = vpop.trf.xlu0
        %v363 = vpop.trf.xlu0
        %v364 = vpop.trf.xlu0
        %v365 = vpop.trf.xlu0
        %v366 = vpop.trf.xlu0
        %v367 = vpop.trf.xlu0
        %v368 = vpop.trf.xlu0
        %v369 = vpop.trf.xlu0
        %v370 = vpop.trf.xlu0
        %v371 = vpop.trf.xlu0
        %v372 = vpop.trf.xlu0
        %v373 = vpop.trf.xlu0
        %v374 = vpop.trf.xlu0
        %v375 = vpop.trf.xlu0
        %v376 = vlaneseq
        %v377 = vshrl.u32 %v376, 7
        %v378 = vsub.s32 0, %v377
        %v379 = vrot.slane %v360, %v378
        %vm380 = vcmp.eq.s32.totalorder %v319, %v379
        %v381 = vsel %vm380, 1, 0
        %v382 = vcvt.s32.f32 %v381
        %v384 = vsel %vm330, %v382, 0
        %386 = vmatprep.subr.mxu0 0.0
        %387 = vmatpush1.msra.mxu0 %v234
        %388 = vmatprep.subr.mxu0 0.0
        %389 = vmatpush1.msra.mxu0 0.0
        %390 = vmatprep.subr.mxu0 0.0
        %391 = vmatpush1.msra.mxu0 0.0
        %392 = vmatprep.subr.mxu0 0.0
        %393 = vmatpush1.msra.mxu0 0.0
        %394 = vmatprep.subr.mxu0 0.0
        %395 = vmatpush1.msra.mxu0 0.0
        %396 = vmatprep.subr.mxu0 0.0
        %397 = vmatpush1.msra.mxu0 0.0
        %398 = vmatprep.subr.mxu0 0.0
        %399 = vmatpush1.msra.mxu0 0.0
        %400 = vmatprep.subr.mxu0 0.0
        %401 = vmatpush1.msra.mxu0 0.0
        %402 = vmatprep.subr.mxu0 0.0
        %403 = vmatpush1.msra.mxu0 0.0
        %404 = vmatprep.subr.mxu0 0.0
        %405 = vmatpush1.msra.mxu0 0.0
        %406 = vmatprep.subr.mxu0 0.0
        %407 = vmatpush1.msra.mxu0 0.0
        %408 = vmatprep.subr.mxu0 0.0
        %409 = vmatpush1.msra.mxu0 0.0
        %410 = vmatprep.subr.mxu0 0.0
        %411 = vmatpush1.msra.mxu0 0.0
        %412 = vmatprep.subr.mxu0 0.0
        %413 = vmatpush1.msra.mxu0 0.0
        %414 = vmatprep.subr.mxu0 0.0
        %415 = vmatpush1.msra.mxu0 0.0
        %416 = vmatprep.subr.mxu0 0.0
        %417 = vmatpush1.msra.mxu0 0.0
        %418 = vmatprep.subr.mxu0 0.0
        %419 = vmatpush1.msra.mxu0 0.0
        %420 = vmatprep.subr.mxu0 0.0
        %421 = vmatpush1.msra.mxu0 0.0
        %422 = vmatprep.subr.mxu0 0.0
        %423 = vmatpush1.msra.mxu0 0.0
        %424 = vmatprep.subr.mxu0 0.0
        %425 = vmatpush1.msra.mxu0 0.0
        %426 = vmatprep.subr.mxu0 0.0
        %427 = vmatpush1.msra.mxu0 0.0
        %428 = vmatprep.subr.mxu0 0.0
        %429 = vmatpush1.msra.mxu0 0.0
        %430 = vmatprep.subr.mxu0 0.0
        %431 = vmatpush1.msra.mxu0 0.0
        %432 = vmatprep.subr.mxu0 0.0
        %433 = vmatpush1.msra.mxu0 0.0
        %434 = vmatprep.subr.mxu0 0.0
        %435 = vmatpush1.msra.mxu0 0.0
        %436 = vmatprep.subr.mxu0 0.0
        %437 = vmatpush1.msra.mxu0 0.0
        %438 = vmatprep.subr.mxu0 0.0
        %439 = vmatpush1.msra.mxu0 0.0
        %440 = vmatprep.subr.mxu0 0.0
        %441 = vmatpush1.msra.mxu0 0.0
        %442 = vmatprep.subr.mxu0 0.0
        %443 = vmatpush1.msra.mxu0 0.0
        %444 = vmatprep.subr.mxu0 0.0
        %445 = vmatpush1.msra.mxu0 0.0
        %446 = vmatprep.subr.mxu0 0.0
        %447 = vmatpush1.msra.mxu0 0.0
        %448 = vmatprep.subr.mxu0 0.0
        %449 = vmatpush1.msra.mxu0 0.0
        %450 = vmatprep.mubr.f32.mxu0 0.0
        %451 = vmatmul.mubr.f32.gmra.mrb[0].mxu0 %v384
        %v452 = vpop.f32.mrb[0].mxu0
        %v453 = vadd.f32 0.0, %v452
        %v454 = vpop.f32.mrb[0].mxu0
        %455 = vdwg.mxu0
        %vm456 = vcmask 261120
        %457 = vst.msk [vmem:[%s226] sm:$0xff] %vm456, %v453
        %v458 = vsel %vm236, %v235, %v285
        %vm459 = vcmask 138240
        %v460 = vsel %vm459, %v458, 0.0
        %461 = vmatprep.subr.mxu0 0.0
        %462 = vmatpush1.msra.mxu0 %v460
        %463 = vmatprep.subr.mxu0 0.0
        %464 = vmatpush1.msra.mxu0 0.0
        %465 = vmatprep.subr.mxu0 0.0
        %466 = vmatpush1.msra.mxu0 0.0
        %467 = vmatprep.subr.mxu0 0.0
        %468 = vmatpush1.msra.mxu0 0.0
        %469 = vmatprep.subr.mxu0 0.0
        %470 = vmatpush1.msra.mxu0 0.0
        %471 = vmatprep.subr.mxu0 0.0
        %472 = vmatpush1.msra.mxu0 0.0
        %473 = vmatprep.subr.mxu0 0.0
        %474 = vmatpush1.msra.mxu0 0.0
        %475 = vmatprep.subr.mxu0 0.0
        %476 = vmatpush1.msra.mxu0 0.0
        %477 = vmatprep.subr.mxu0 0.0
        %478 = vmatpush1.msra.mxu0 0.0
        %479 = vmatprep.subr.mxu0 0.0
        %480 = vmatpush1.msra.mxu0 0.0
        %481 = vmatprep.subr.mxu0 0.0
        %482 = vmatpush1.msra.mxu0 0.0
        %483 = vmatprep.subr.mxu0 0.0
        %484 = vmatpush1.msra.mxu0 0.0
        %485 = vmatprep.subr.mxu0 0.0
        %486 = vmatpush1.msra.mxu0 0.0
        %487 = vmatprep.subr.mxu0 0.0
        %488 = vmatpush1.msra.mxu0 0.0
        %489 = vmatprep.subr.mxu0 0.0
        %490 = vmatpush1.msra.mxu0 0.0
        %491 = vmatprep.subr.mxu0 0.0
        %492 = vmatpush1.msra.mxu0 0.0
        %493 = vmatprep.subr.mxu0 0.0
        %494 = vmatpush1.msra.mxu0 0.0
        %495 = vmatprep.subr.mxu0 0.0
        %496 = vmatpush1.msra.mxu0 0.0
        %497 = vmatprep.subr.mxu0 0.0
        %498 = vmatpush1.msra.mxu0 0.0
        %499 = vmatprep.subr.mxu0 0.0
        %500 = vmatpush1.msra.mxu0 0.0
        %501 = vmatprep.subr.mxu0 0.0
        %502 = vmatpush1.msra.mxu0 0.0
        %503 = vmatprep.subr.mxu0 0.0
        %504 = vmatpush1.msra.mxu0 0.0
        %505 = vmatprep.subr.mxu0 0.0
        %506 = vmatpush1.msra.mxu0 0.0
        %507 = vmatprep.subr.mxu0 0.0
        %508 = vmatpush1.msra.mxu0 0.0
        %509 = vmatprep.subr.mxu0 0.0
        %510 = vmatpush1.msra.mxu0 0.0
        %511 = vmatprep.subr.mxu0 0.0
        %512 = vmatpush1.msra.mxu0 0.0
        %513 = vmatprep.subr.mxu0 0.0
        %514 = vmatpush1.msra.mxu0 0.0
        %515 = vmatprep.subr.mxu0 0.0
        %516 = vmatpush1.msra.mxu0 0.0
        %517 = vmatprep.subr.mxu0 0.0
        %518 = vmatpush1.msra.mxu0 0.0
        %519 = vmatprep.subr.mxu0 0.0
        %520 = vmatpush1.msra.mxu0 0.0
        %521 = vmatprep.subr.mxu0 0.0
        %522 = vmatpush1.msra.mxu0 0.0
        %523 = vmatprep.subr.mxu0 0.0
        %524 = vmatpush1.msra.mxu0 0.0
        %525 = vmatprep.mubr.f32.mxu0 0.0
        %526 = vmatmul.mubr.f32.gmra.mrb[0].mxu0 %v384
        %v527 = vpop.f32.mrb[0].mxu0
        %v528 = vadd.f32 0.0, %v527
        %v529 = vpop.f32.mrb[0].mxu0
        %530 = vdwg.mxu0
        %531 = vst [vmem:[%s233] sm:$0xff] %v528
        %s532 = sand.u32 %s87, 1
        %s533 = scalar_lea.sflag [#allocation4], %s532
        %s534 = sand.u32 %s87, 1
        %s535 = smul.addr %s534, 8
        %s536 = scalar_lea.vmem [#allocation7], %s535
        %s537 = sand.u32 %s113, 1
        %s538 = scalar_lea.sflag [#allocation9], %s537
        %s539 = sand.u32 %s113, 1
        %s540 = smul.addr %s539, 8
        %s541 = scalar_lea.vmem [#allocation8], %s540
        // Predicated region
        $region37: #{tpu_custom_call.1} parent=27 // pred_check
          %p542 = pneg %p97
        $region38: #{tpu_custom_call.1} parent=27 // pred_check_branch
          %544 = sbr.rel (%p542) target = $region40
        $region39: #{tpu_custom_call.1} parent=27 // pred_region
          %s546 = ssub.s32 128, 128
          %547 = vsyncadd %s533, %s546
          %s548 = smul.addr %s27, 128
          %s549 = scalar_lea.hbm %s2, %s548
          %s551 = sshll.u32 %s536, 4
          %s552 = int_to_ptr.vmem [resolvable:$true] %s551
          %554 = dma.vmem_to_hbm [thread:$0]  %s552, 128, %s549, %s533
        $region40: #{tpu_custom_call.1} parent=27 // pred_fallthru
          _
        // Predicated region
        $region41: #{tpu_custom_call.1} parent=27 // pred_check
          %p555 = pneg %p123
        $region42: #{tpu_custom_call.1} parent=27 // pred_check_branch
          %557 = sbr.rel (%p555) target = $region44
        $region43: #{tpu_custom_call.1} parent=27 // pred_region
          %s559 = ssub.s32 128, 128
          %560 = vsyncadd %s538, %s559
          %s561 = smul.addr %s27, 128
          %s562 = scalar_lea.hbm %s3, %s561
          %s564 = sshll.u32 %s541, 4
          %s565 = int_to_ptr.vmem [resolvable:$true] %s564
          %567 = dma.vmem_to_hbm [thread:$0]  %s565, 128, %s562, %s538
        $region44: #{tpu_custom_call.1} parent=27 // pred_fallthru
          _
      $region28: #{tpu_custom_call.1} parent=5 // pred_fallthru
        _
      %p568 = scmp.le.s32.totalorder 2, %s22
      // Predicated region
      $region45: #{tpu_custom_call.1} parent=5 // pred_check
        %p569 = pneg %p568
      $region46: #{tpu_custom_call.1} parent=5 // pred_check_branch
        %571 = sbr.rel (%p569) target = $region48
      $region47: #{tpu_custom_call.1} parent=5 // pred_region
        %s572 = ssub.s32 %s22, 2
        // Predicated region
        $region49: #{tpu_custom_call.1} parent=47 // pred_check
          %p573 = pneg %p103
        $region50: #{tpu_custom_call.1} parent=47 // pred_check_branch
          %575 = sbr.rel (%p573) target = $region52
        $region51: #{tpu_custom_call.1} parent=47 // pred_region
          %s576 = sand.u32 %s88, 1
          %s577 = scalar_lea.sflag [#allocation4], %s576
          %s578 = sand.u32 %s88, 1
          %s579 = smul.addr %s578, 8
          %s580 = scalar_lea.vmem [#allocation7], %s579
          %581 = dma.done %s577, 128
        $region52: #{tpu_custom_call.1} parent=47 // pred_fallthru
          _
        // Predicated region
        $region53: #{tpu_custom_call.1} parent=47 // pred_check
          %p582 = pneg %p129
        $region54: #{tpu_custom_call.1} parent=47 // pred_check_branch
          %584 = sbr.rel (%p582) target = $region56
        $region55: #{tpu_custom_call.1} parent=47 // pred_region
          %s585 = sand.u32 %s114, 1
          %s586 = scalar_lea.sflag [#allocation9], %s585
          %s587 = sand.u32 %s114, 1
          %s588 = smul.addr %s587, 8
          %s589 = scalar_lea.vmem [#allocation8], %s588
          %590 = dma.done %s586, 128
        $region56: #{tpu_custom_call.1} parent=47 // pred_fallthru
          _
      $region48: #{tpu_custom_call.1} parent=5 // pred_fallthru
        _
    $region6: #{tpu_custom_call.1} parent=1 // loop_footer
      %s26 = sadd.s32 1, %s22
    $region7: #{tpu_custom_call.1} parent=1 // loop_footer_branch
      %21 = sbr.rel target = $region3
    $region8: #{tpu_custom_call.1} parent=1 // loop_exit
      _
    %591 = vsyncpa [#allocation3], 1
    %s592 = scalar_lea.sflag [#allocation3], 1
    %593 = vsyncpa %s592, 1
    %594 = vsyncpa [#allocation6], 1
    %s595 = scalar_lea.sflag [#allocation6], 1
    %596 = vsyncpa %s595, 1
    %597 = vsyncpa [#allocation4], 1
    %s598 = scalar_lea.sflag [#allocation4], 1
    %599 = vsyncpa %s598, 1
    %600 = vsyncpa [#allocation9], 1
    %s601 = scalar_lea.sflag [#allocation9], 1
    %602 = vsyncpa %s601, 1

</llo_original>
